<compile_context>
chip_gen: v7x
topology: tpu7x:2x2x1
jax: 0.10.0
libtpu: 0.0.40
codegen_flags: <defaults>
</compile_context>

<pallas_src>
import jax
import jax.numpy as jnp
from jax.experimental import pallas as pl
from jax.experimental.pallas import tpu as pltpu


def _round_up(a, m):
    return ((a + m - 1) // m) * m


def _pick_tk(hw_p, max_tk=2048):
    """Largest multiple of 128 that divides hw_p and is <= max_tk (no wasted K padding)."""
    units = hw_p // 128
    best = 1
    d = 1
    while d <= units and d * 128 <= max_tk:
        if units % d == 0:
            best = d
        d += 1
    return best * 128


# --------------------------------------------------------------------------------------
# Kernels
# --------------------------------------------------------------------------------------
def _mm_single_k_kernel(a_ref, m_ref, o_ref):
    """Single K step: o = a @ m.  No scratch; f32 accumulation inside the MXU."""
    o_ref[...] = jnp.dot(
        a_ref[...], m_ref[...], preferred_element_type=jnp.float32
    ).astype(o_ref.dtype)


def _mm_acc_kernel(a_ref, m_ref, o_ref, acc_ref):
    """Tiled matmul over a K grid axis with f32 accumulator and init/finalize."""
    @pl.when(pl.program_id(2) == 0)
    def _():
        acc_ref[...] = jnp.zeros_like(acc_ref)

    acc_ref[...] += jnp.dot(a_ref[...], m_ref[...],
                            preferred_element_type=jnp.float32)

    @pl.when(pl.program_id(2) == pl.num_programs(2) - 1)
    def _():
        o_ref[...] = acc_ref[...].astype(o_ref.dtype)


# --------------------------------------------------------------------------------------
# Interpolation matrix (depends only on theta/phi — built once per call in the wrapper)
# --------------------------------------------------------------------------------------
def _build_interp_matrix(theta, phi, H, W, hw_p, n_out_p, dtype):
    """Bilinear interpolation matrix, shape (hw_p, n_out_p), cast to `dtype`.

    Column j holds the 4 bilinear weights of output sample j (grid_sample with
    align_corners=True, zeros padding).  Rows >= H*W and columns >= n_out are zero."""
    P, Q, Wout = theta.shape
    n_out = P * Q * Wout

    gx = (theta / jnp.pi).reshape(n_out).astype(jnp.float32)        # x (width)  in [-1, 1]
    gy = (-phi / jnp.pi * 2.0).reshape(n_out).astype(jnp.float32)   # y (height) in [-1, 1]

    ix = (gx + 1.0) * 0.5 * (W - 1)
    iy = (gy + 1.0) * 0.5 * (H - 1)

    x0f = jnp.floor(ix)
    y0f = jnp.floor(iy)
    fx = ix - x0f
    fy = iy - y0f

    x0 = x0f.astype(jnp.int32)
    y0 = y0f.astype(jnp.int32)
    x1 = x0 + 1
    y1 = y0 + 1

    cols = jnp.arange(n_out)
    M = jnp.zeros((hw_p, n_out_p), dtype=jnp.float32)

    def add_corner(Mm, yi, xi, w):
        valid = (xi >= 0) & (xi < W) & (yi >= 0) & (yi < H)
        w = jnp.where(valid, w, 0.0)                      # zeros padding for OOB corners
        flat = jnp.clip(yi, 0, H - 1) * W + jnp.clip(xi, 0, W - 1)
        return Mm.at[flat, cols].add(w)

    M = add_corner(M, y0, x0, (1.0 - fy) * (1.0 - fx))
    M = add_corner(M, y0, x1, (1.0 - fy) * fx)
    M = add_corner(M, y1, x0, fy * (1.0 - fx))
    M = add_corner(M, y1, x1, fy * fx)
    return M.astype(dtype)


# --------------------------------------------------------------------------------------
# Wrapper
# --------------------------------------------------------------------------------------
def tangent_patch(x, theta, phi, *, compute_dtype=jnp.bfloat16):
    """Equivalent of TangentPatch(theta, phi).forward(x).

    x:     (B, C, H, W)  NCHW
    theta: (P, Q, Wout)
    phi:   (P, Q, Wout)
    returns (B, C, P, Q, Wout), dtype of x.

    compute_dtype controls the matmul operand dtype (bf16 by default; accumulation is
    always f32).  Use jnp.float32 if bit-accuracy vs the f32 reference is required.
    """
    P, Q, Wout = theta.shape
    B, C, H, W = x.shape
    HW = H * W
    n_out = P * Q * Wout
    BC = B * C

    lane = 128
    n_out_p = _round_up(n_out, lane)
    hw_p = _round_up(HW, lane)

    # N tile: 256-wide fills the v6e/v7x MXU and halves grid steps; lane-dense either way.
    tn = 256 if n_out_p % 256 == 0 else 128

    # Row tile: bf16 sublane packing wants multiples of 16.
    row_align = 16 if compute_dtype == jnp.bfloat16 else 8
    tm = 256 if BC >= 256 else _round_up(BC, row_align)
    bc_p = _round_up(BC, tm)

    # Interpolation matrix (built once; padded rows/cols are zero so padding is a no-op).
    Mmat = _build_interp_matrix(theta, phi, H, W, hw_p, n_out_p, compute_dtype)

    # Fuse B and C into the matmul row dimension; single fused pad + cast.
    a = x.reshape(BC, HW).astype(compute_dtype)
    if bc_p > BC or hw_p > HW:
        a = jnp.pad(a, ((0, bc_p - BC), (0, hw_p - HW)))

    m_bytes = hw_p * n_out_p * jnp.dtype(compute_dtype).itemsize
    single_k = (hw_p <= 4096) and (m_bytes <= 4 * 1024 * 1024)

    if single_k:
        # Fast path: one K step, no accumulator.  A's block index is constant across j and
        # M's is constant across i, so each operand is DMA'd from HBM exactly once.
        grid = (bc_p // tm, n_out_p // tn)
        out = pl.pallas_call(
            _mm_single_k_kernel,
            out_shape=jax.ShapeDtypeStruct((bc_p, n_out_p), x.dtype),
            grid_spec=pltpu.PrefetchScalarGridSpec(
                num_scalar_prefetch=0,
                grid=grid,
                in_specs=[
                    pl.BlockSpec((tm, hw_p), lambda i, j: (i, 0)),
                    pl.BlockSpec((hw_p, tn), lambda i, j: (0, j)),
                ],
                out_specs=pl.BlockSpec((tm, tn), lambda i, j: (i, j)),
            ),
            compiler_params=pltpu.CompilerParams(
                dimension_semantics=("parallel", "parallel"),
            ),
        )(a, Mmat)
    else:
        # Fallback: tiled K.  tk divides the padded HW exactly (no zero K-blocks DMA'd).
        tk = _pick_tk(hw_p)
        grid = (bc_p // tm, n_out_p // tn, hw_p // tk)
        out = pl.pallas_call(
            _mm_acc_kernel,
            out_shape=jax.ShapeDtypeStruct((bc_p, n_out_p), x.dtype),
            grid_spec=pltpu.PrefetchScalarGridSpec(
                num_scalar_prefetch=0,
                grid=grid,
                in_specs=[
                    pl.BlockSpec((tm, tk), lambda i, j, k: (i, k)),
                    pl.BlockSpec((tk, tn), lambda i, j, k: (k, j)),
                ],
                out_specs=pl.BlockSpec((tm, tn), lambda i, j, k: (i, j)),
                scratch_shapes=[pltpu.VMEM((tm, tn), jnp.float32)],
            ),
            compiler_params=pltpu.CompilerParams(
                dimension_semantics=("parallel", "parallel", "arbitrary"),
            ),
        )(a, Mmat)

    out = out[:BC, :n_out]
    # grid_sample output (B, C, Hout, Wout) -> unflatten(-2, (P, Q)) -> (B, C, P, Q, Wout)
    return out.reshape(B, C, P, Q, Wout)


# --------------------------------------------------------------------------------------
# Pure-JAX reference (exact f32 semantics of F.grid_sample bilinear/align_corners=True/zeros)
# --------------------------------------------------------------------------------------
def _ref_tangent_patch(x, theta, phi):
    P, Q, Wout = theta.shape
    B, C, H, W = x.shape
    gx = (theta / jnp.pi).reshape(P * Q, Wout)
    gy = (-phi / jnp.pi * 2.0).reshape(P * Q, Wout)
    ix = (gx + 1.0) * 0.5 * (W - 1)
    iy = (gy + 1.0) * 0.5 * (H - 1)
    x0 = jnp.floor(ix).astype(jnp.int32)
    y0 = jnp.floor(iy).astype(jnp.int32)
    x1 = x0 + 1
    y1 = y0 + 1
    fx = ix - x0
    fy = iy - y0

    def gather(yi, xi, w):
        valid = (xi >= 0) & (xi < W) & (yi >= 0) & (yi < H)
        xc = jnp.clip(xi, 0, W - 1)
        yc = jnp.clip(yi, 0, H - 1)
        v = x[:, :, yc, xc]  # (B, C, Hout, Wout)
        return v * (w * valid)[None, None]

    out = (gather(y0, x0, (1.0 - fy) * (1.0 - fx))
           + gather(y0, x1, (1.0 - fy) * fx)
           + gather(y1, x0, fy * (1.0 - fx))
           + gather(y1, x1, fy * fx))
    return out.reshape(B, C, P, Q, Wout)


if __name__ == "__main__":
    key = jax.random.PRNGKey(0)
    k1, k2, k3 = jax.random.split(key, 3)

    B, C, H, W = 2, 4, 16, 16
    P, Q, Wout = 4, 2, 8

    x = jax.random.normal(k1, (B, C, H, W), dtype=jnp.float32)
    # theta in [-pi, pi], phi in [-pi/2, pi/2] -> grid coords in [-1, 1]
    theta = jax.random.uniform(k2, (P, Q, Wout), minval=-jnp.pi, maxval=jnp.pi,
                               dtype=jnp.float32)
    phi = jax.random.uniform(k3, (P, Q, Wout), minval=-jnp.pi / 2, maxval=jnp.pi / 2,
                             dtype=jnp.float32)

    fn = jax.jit(tangent_patch)
    out = fn(x, theta, phi)
    out = jax.block_until_ready(out)

    ref = _ref_tangent_patch(x, theta, phi)
    assert out.shape == (B, C, P, Q, Wout), out.shape
    # bf16 operands (default compute_dtype) => ~1e-3 relative error on weights/values.
    err = float(jnp.max(jnp.abs(out.astype(jnp.float32) - ref)))
    assert jnp.allclose(out.astype(jnp.float32), ref, atol=3e-2, rtol=3e-2), err

    print("KERNEL_OK")
</pallas_src>

<mosaic_0001>
module attributes {stable_mosaic.version = 11 : i64} {
  func.func private @main(%arg0: i32) attributes {dimension_semantics = [#tpu.dimension_semantics<core_parallel>], iteration_bounds = array<i64: 2>, tpu.core_type = #tpu.core_type<sc_scalar_subcore>, window_params = []} {
    return
  }
}

module attributes {stable_mosaic.version = 11 : i64} {
  func.func private @main(%arg0: i32) attributes {dimension_semantics = [#tpu.dimension_semantics<core_parallel>], iteration_bounds = array<i64: 2>, tpu.core_type = #tpu.core_type<sc_scalar_subcore>, window_params = []} {
    return
  }
}

module attributes {stable_mosaic.version = 11 : i64} {
  func.func @_mm_single_k_kernel(%arg0: i32, %arg1: i32, %arg2: memref<16x256xbf16, #tpu.memory_space<vmem>>, %arg3: memref<256x128xbf16, #tpu.memory_space<vmem>>, %arg4: memref<16x128xf32, #tpu.memory_space<vmem>>) attributes {dimension_semantics = [#tpu.dimension_semantics<parallel>, #tpu.dimension_semantics<parallel>], iteration_bounds = array<i64: 1, 1>, scalar_prefetch = 0 : i64, scratch_operands = 0 : i64, tpu.core_type = #tpu.core_type<tc>, window_params = [{transform_indices = @transform_0, window_bounds = array<i64: 16, 256>}, {transform_indices = @transform_1, window_bounds = array<i64: 256, 128>}, {transform_indices = @transform_2, window_bounds = array<i64: 16, 128>}]} {
    %c0 = arith.constant 0 : index
    %c0_0 = arith.constant 0 : index
    %0 = vector.load %arg2[%c0, %c0_0] : memref<16x256xbf16, #tpu.memory_space<vmem>>, vector<16x256xbf16>
    %c0_1 = arith.constant 0 : index
    %c0_2 = arith.constant 0 : index
    %1 = vector.load %arg3[%c0_1, %c0_2] : memref<256x128xbf16, #tpu.memory_space<vmem>>, vector<256x128xbf16>
    %cst = arith.constant dense<0.000000e+00> : vector<16x128xf32>
    %2 = tpu.matmul %0, %1, %cst {dimension_numbers = #tpu.dot_dimension_numbers<[1], [0], [0], [1], [0, 0, 1, 1], [], []>} : vector<16x256xbf16>, vector<256x128xbf16>, vector<16x128xf32> -> vector<16x128xf32>
    %c0_3 = arith.constant 0 : index
    %c0_4 = arith.constant 0 : index
    %3 = vector.load %arg4[%c0_3, %c0_4] : memref<16x128xf32, #tpu.memory_space<vmem>>, vector<16x128xf32>
    tpu.vector_store %arg4[%c0_3, %c0_4], %2 {strides = array<i32>} : memref<16x128xf32, #tpu.memory_space<vmem>>, vector<16x128xf32>,
    return
  }
  func.func @transform_0(%arg0: i32, %arg1: i32) -> (i32, i32) {
    %c0_i32 = arith.constant 0 : i32
    %c0_i32_0 = arith.constant 0 : i32
    return %arg0, %c0_i32 : i32, i32
  }
  func.func @transform_1(%arg0: i32, %arg1: i32) -> (i32, i32) {
    %c0_i32 = arith.constant 0 : i32
    %c0_i32_0 = arith.constant 0 : i32
    return %c0_i32, %arg1 : i32, i32
  }
  func.func @transform_2(%arg0: i32, %arg1: i32) -> (i32, i32) {
    %c0_i32 = arith.constant 0 : i32
    return %arg0, %arg1 : i32, i32
  }
}

</mosaic_0001>

<llo_original>
// kernel: tangent_patch.1
$region0: #{tangent_patch.1}
  #allocation0 [shape = 'u32[]', space=smem, size = 0x4, offset = 0x4, fixed_abs, tag = 'smem constant byte address 0x4 - core index']
  #allocation1 [shape = 'u32[144,128]{1,0:T(1,128)}', space=vmem, size = 0x12000, scoped, tag = 'internal scratch']
  %s0 = inlined_call_operand.vmem [shape: bf16[16,256], index: 0, kind: input, shape index: {}]
  %s1 = inlined_call_operand.vmem [shape: bf16[256,128], index: 1, kind: input, shape index: {}]
  %s2 = inlined_call_operand.vmem [shape: f32[16,128], index: 2, kind: output, shape index: {}]
  %s3 = sld [smem:[#allocation0]]
  $region18: #{tangent_patch.1} parent=0
    _
  %s5 = ssub.s32 1, %s3
  %s6 = scalar_select 0, %s5, %s3
  // Predicated region
  $region2: #{tangent_patch.1} parent=0 // pred_check
    _
  $region3: #{tangent_patch.1} parent=0 // pred_check_branch
    %8 = sbr.rel (0) target = $region5
  $region4: #{tangent_patch.1} parent=0 // pred_region
    _
  $region5: #{tangent_patch.1} parent=0 // pred_fallthru
    _
  // Predicated region
  $region6: #{tangent_patch.1} parent=0 // pred_check
    _
  $region7: #{tangent_patch.1} parent=0 // pred_check_branch
    %10 = sbr.rel (0) target = $region9
  $region8: #{tangent_patch.1} parent=0 // pred_region
    _
  $region9: #{tangent_patch.1} parent=0 // pred_fallthru
    _
  %v12 = vld [vmem:[%s0] sm:$0xff]
  %v13 = vld [vmem:[%s0 + $0x8] sm:$0xff]
  %v14 = vld [vmem:[%s1] sm:$0xf]
  %v15 = vld [vmem:[%s1 + $0x4] sm:$0xf]
  %v16 = vld [vmem:[%s1 + $0x8] sm:$0xf]
  %v17 = vld [vmem:[%s1 + $0xc] sm:$0xf]
  %v18 = vld [vmem:[%s1 + $0x10] sm:$0xf]
  %v19 = vld [vmem:[%s1 + $0x14] sm:$0xf]
  %v20 = vld [vmem:[%s1 + $0x18] sm:$0xf]
  %v21 = vld [vmem:[%s1 + $0x1c] sm:$0xf]
  %v22 = vld [vmem:[%s1 + $0x20] sm:$0xf]
  %v23 = vld [vmem:[%s1 + $0x24] sm:$0xf]
  %v24 = vld [vmem:[%s1 + $0x28] sm:$0xf]
  %v25 = vld [vmem:[%s1 + $0x2c] sm:$0xf]
  %v26 = vld [vmem:[%s1 + $0x30] sm:$0xf]
  %v27 = vld [vmem:[%s1 + $0x34] sm:$0xf]
  %v28 = vld [vmem:[%s1 + $0x38] sm:$0xf]
  %v29 = vld [vmem:[%s1 + $0x3c] sm:$0xf]
  %v30 = vld [vmem:[%s1 + $0x40] sm:$0xf]
  %v31 = vld [vmem:[%s1 + $0x44] sm:$0xf]
  %v32 = vld [vmem:[%s1 + $0x48] sm:$0xf]
  %v33 = vld [vmem:[%s1 + $0x4c] sm:$0xf]
  %v34 = vld [vmem:[%s1 + $0x50] sm:$0xf]
  %v35 = vld [vmem:[%s1 + $0x54] sm:$0xf]
  %v36 = vld [vmem:[%s1 + $0x58] sm:$0xf]
  %v37 = vld [vmem:[%s1 + $0x5c] sm:$0xf]
  %v38 = vld [vmem:[%s1 + $0x60] sm:$0xf]
  %v39 = vld [vmem:[%s1 + $0x64] sm:$0xf]
  %v40 = vld [vmem:[%s1 + $0x68] sm:$0xf]
  %v41 = vld [vmem:[%s1 + $0x6c] sm:$0xf]
  %v42 = vld [vmem:[%s1 + $0x70] sm:$0xf]
  %v43 = vld [vmem:[%s1 + $0x74] sm:$0xf]
  %v44 = vld [vmem:[%s1 + $0x78] sm:$0xf]
  %v45 = vld [vmem:[%s1 + $0x7c] sm:$0xf]
  %v48 = vunpack.c.l.b16 %v12
  %v49 = vunpack.c.h.b16 %v12
  %v50 = vunpack.c.l.b16 %v13
  %v51 = vunpack.c.h.b16 %v13
  %v52 = vpack.c.b16 %v50, %v48
  %v53 = vpack.c.b16 %v51, %v49
  %v88 = vunpack.c.l.b16 %v14
  %v89 = vunpack.c.l.b16 %v15
  %v90 = vunpack.c.l.b16 %v16
  %v91 = vunpack.c.l.b16 %v17
  %v92 = vunpack.c.l.b16 %v18
  %v93 = vunpack.c.l.b16 %v19
  %v94 = vunpack.c.l.b16 %v20
  %v95 = vunpack.c.l.b16 %v21
  %v96 = vunpack.c.l.b16 %v22
  %v97 = vunpack.c.l.b16 %v23
  %v98 = vunpack.c.l.b16 %v24
  %v99 = vunpack.c.l.b16 %v25
  %v100 = vunpack.c.l.b16 %v26
  %v101 = vunpack.c.l.b16 %v27
  %v102 = vunpack.c.l.b16 %v28
  %v103 = vunpack.c.l.b16 %v29
  %v104 = vunpack.c.l.b16 %v30
  %v105 = vunpack.c.l.b16 %v31
  %v106 = vunpack.c.l.b16 %v32
  %v107 = vunpack.c.l.b16 %v33
  %v108 = vunpack.c.l.b16 %v34
  %v109 = vunpack.c.l.b16 %v35
  %v110 = vunpack.c.l.b16 %v36
  %v111 = vunpack.c.l.b16 %v37
  %v112 = vunpack.c.l.b16 %v38
  %v113 = vunpack.c.l.b16 %v39
  %v114 = vunpack.c.l.b16 %v40
  %v115 = vunpack.c.l.b16 %v41
  %v116 = vunpack.c.l.b16 %v42
  %v117 = vunpack.c.l.b16 %v43
  %v118 = vunpack.c.l.b16 %v44
  %v119 = vunpack.c.l.b16 %v45
  %v120 = vpack.c.b16 %v89, %v88
  %v121 = vpack.c.b16 %v91, %v90
  %v122 = vpack.c.b16 %v93, %v92
  %v123 = vpack.c.b16 %v95, %v94
  %v124 = vpack.c.b16 %v97, %v96
  %v125 = vpack.c.b16 %v99, %v98
  %v126 = vpack.c.b16 %v101, %v100
  %v127 = vpack.c.b16 %v103, %v102
  %v128 = vpack.c.b16 %v105, %v104
  %v129 = vpack.c.b16 %v107, %v106
  %v130 = vpack.c.b16 %v109, %v108
  %v131 = vpack.c.b16 %v111, %v110
  %v132 = vpack.c.b16 %v113, %v112
  %v133 = vpack.c.b16 %v115, %v114
  %v134 = vpack.c.b16 %v117, %v116
  %v135 = vpack.c.b16 %v119, %v118
  %152 = vmatprep.subr.bf16.mxu0 0
  %153 = vmatpush1.bf16.msra.mxu0 %v120
  %154 = vmatprep.subr.bf16.mxu0 0
  %155 = vmatpush1.bf16.msra.mxu0 %v121
  %156 = vmatprep.subr.bf16.mxu0 0
  %157 = vmatpush1.bf16.msra.mxu0 %v122
  %158 = vmatprep.subr.bf16.mxu0 0
  %159 = vmatpush1.bf16.msra.mxu0 %v123
  %160 = vmatprep.subr.bf16.mxu0 0
  %161 = vmatpush1.bf16.msra.mxu0 %v124
  %162 = vmatprep.subr.bf16.mxu0 0
  %163 = vmatpush1.bf16.msra.mxu0 %v125
  %164 = vmatprep.subr.bf16.mxu0 0
  %165 = vmatpush1.bf16.msra.mxu0 %v126
  %166 = vmatprep.subr.bf16.mxu0 0
  %167 = vmatpush1.bf16.msra.mxu0 %v127
  %168 = vmatprep.subr.bf16.mxu0 0
  %169 = vmatpush1.bf16.msra.mxu0 %v128
  %170 = vmatprep.subr.bf16.mxu0 0
  %171 = vmatpush1.bf16.msra.mxu0 %v129
  %172 = vmatprep.subr.bf16.mxu0 0
  %173 = vmatpush1.bf16.msra.mxu0 %v130
  %174 = vmatprep.subr.bf16.mxu0 0
  %175 = vmatpush1.bf16.msra.mxu0 %v131
  %176 = vmatprep.subr.bf16.mxu0 0
  %177 = vmatpush1.bf16.msra.mxu0 %v132
  %178 = vmatprep.subr.bf16.mxu0 0
  %179 = vmatpush1.bf16.msra.mxu0 %v133
  %180 = vmatprep.subr.bf16.mxu0 0
  %181 = vmatpush1.bf16.msra.mxu0 %v134
  %182 = vmatprep.subr.bf16.mxu0 0
  %183 = vmatpush1.bf16.msra.mxu0 %v135
  %184 = vmatprep.mubr.bf16.mxu0 %v53
  %185 = vmatmul.mubr.bf16.gmra.mrb[0].mxu0 %v52
  %v186 = vpop.f32.mrb[0].mxu0
  %v187 = vadd.f32 0.0, %v186
  %v188 = vpop.f32.mrb[0].mxu0
  %v189 = vpop.f32.mrb[0].mxu0
  %v190 = vadd.f32 0.0, %v189
  %v191 = vpop.f32.mrb[0].mxu0
  %192 = vdwg.mxu0
  %193 = vst [vmem:[%s2] sm:$0xff] %v187
  %194 = vst [vmem:[%s2 + $0x8] sm:$0xff] %v190
  // Predicated region
  $region10: #{tangent_patch.1} parent=0 // pred_check
    _
  $region11: #{tangent_patch.1} parent=0 // pred_check_branch
    %196 = sbr.rel (0) target = $region13
  $region12: #{tangent_patch.1} parent=0 // pred_region
    _
  $region13: #{tangent_patch.1} parent=0 // pred_fallthru
    _
  // Predicated region
  $region14: #{tangent_patch.1} parent=0 // pred_check
    _
  $region15: #{tangent_patch.1} parent=0 // pred_check_branch
    %198 = sbr.rel (0) target = $region17
  $region16: #{tangent_patch.1} parent=0 // pred_region
    _
  $region17: #{tangent_patch.1} parent=0 // pred_fallthru
    _

</llo_original>
